<compile_context>
chip_gen: v7x
topology: tpu7x:2x2x1
jax: 0.10.0
libtpu: 0.0.40
codegen_flags: <defaults>
</compile_context>

<pallas_src>
import jax
import jax.numpy as jnp
from jax.experimental import pallas as pl
from jax.experimental.pallas import tpu as pltpu

EPS = 1e-9  # BatchNorm1d eps used by Dice (explicit in the Dice module)


def din_attention_kernel(q_ref, u_ref, w_ref, v_ref, out_ref):
    # One batch tile (TB examples, TB*L flattened behaviour rows) per step.
    TB, C = q_ref.shape
    L = u_ref.shape[0] // TB

    q2 = q_ref[...]                              # (TB, C)    stream dtype
    u2 = u_ref[...]                              # (TB*L, C)  stream dtype

    # Per-example query row replicated over its L behaviour rows (source is
    # tiny; this is the only stream-sized relayout in the kernel).
    q_rep = jnp.broadcast_to(q2[:, None, :], (TB, L, C)).reshape(TB * L, C)
    qu2 = u2 * q_rep                             # (TB*L, C)

    # Folded first-layer weights (wrapper-prepared, stream dtype).
    w_q = w_ref[0:C, :]                          # Wa + Wc   (query term)
    w_u = w_ref[C:2 * C, :]                      # Wb - Wc   (behaviour term)
    w_p = w_ref[2 * C:3 * C, :]                  # Wd        (product term)

    # Packed per-channel f32 vectors.
    b1 = v_ref[0:1, :]                           # Linear(4C,64) bias
    scale = v_ref[1:2, :]                        # gamma * rsqrt(rv + eps)
    shift = v_ref[2:3, :]                        # beta - rm * scale
    alpha = v_ref[3:4, :]                        # Dice alpha (per channel)
    w_out = v_ref[4:5, :]                        # fused (64->16->1) weight
    b_out = v_ref[5:6, 0:1]                      # fused output bias (scalar)

    # Linear(4C -> 64) with the concat folded away.  All dots run on the
    # flattened (TB*L, C) slabs (no behaviour-tile reshapes) and accumulate in
    # f32 on the MXU; the query term rides on q_rep rows instead of a
    # per-example result broadcast, avoiding a (TB*L, H) sublane relayout.
    h1 = (jnp.dot(u2, w_u, preferred_element_type=jnp.float32)
          + jnp.dot(qu2, w_p, preferred_element_type=jnp.float32)
          + jnp.dot(q_rep, w_q, preferred_element_type=jnp.float32)
          + b1)                                                      # (TB*L, H) f32

    # Dice(dim=3), eval-mode BN folded: p = sigmoid(x*scale + shift),
    # out = alpha*(1-p)*x + p*x = x * (alpha + p*(1-alpha)).
    # The sigmoid runs in the stream dtype (bf16 EUP on v6e/v7x); the rest
    # of the Dice / score math stays f32.
    z = h1 * scale + shift
    p = jax.nn.sigmoid(z.astype(u2.dtype)).astype(jnp.float32)
    h1d = h1 * (alpha + p * (1.0 - alpha))                           # (TB*L, H)

    # Fused Linear(64->16) + Linear(16->1): VPU multiply + lane reduce
    # (exact: no activation between the two Linears).
    score = jnp.sum(h1d * w_out, axis=-1, keepdims=True) + b_out     # (TB*L, 1)

    # AttentionSequencePoolingLayer: weight * user_behavior, sum over L.
    weighted = score * u2.astype(jnp.float32)                        # (TB*L, C) f32
    out_ref[...] = jnp.sum(weighted.reshape(TB, L, C), axis=1)       # (TB, C)


def _fold_params(params, c):
    """Fold / pack the 11 PyTorch parameters into 2 kernel inputs (exact)."""
    w1t = params["w1t"]                                    # (4C, H) = W1.T
    h = w1t.shape[1]
    wa, wb, wc, wd = w1t[:c], w1t[c:2 * c], w1t[2 * c:3 * c], w1t[3 * c:4 * c]
    # Note: keep C a multiple of 8 so the kernel's w_ref[0:C]/[C:2C]/[2C:3C]
    # sublane slices stay aligned (pad each segment here if it is not).
    w_stack = jnp.concatenate([wa + wc, wb - wc, wd], axis=0)        # (3C, H)

    scale = params["gamma"] * jax.lax.rsqrt(params["rv"] + EPS)      # (1, H)
    shift = params["beta"] - params["rm"] * scale                    # (1, H)
    w_fused = (params["w2t"] @ params["w3t"]).reshape(h)             # (H,)
    b_fused = (params["b2"] @ params["w3t"] + params["b3"]).reshape(())

    vec = jnp.zeros((8, h), jnp.float32)                             # sublane-aligned pack
    vec = vec.at[0, :].set(params["b1"].reshape(h))
    vec = vec.at[1, :].set(scale.reshape(h))
    vec = vec.at[2, :].set(shift.reshape(h))
    vec = vec.at[3, :].set(params["alpha"].reshape(h))
    vec = vec.at[4, :].set(w_fused)
    vec = vec.at[5, 0].set(b_fused)
    return w_stack.astype(jnp.float32), vec


def _pick_tb(b, L, c, h, budget_bytes):
    """VMEM-budget-driven batch tile.

    Per-example per-step footprint (bytes, f32-conservative):
      double-buffered streams:  2 * (L*C + 2*C) * 4
      ~6 live H-wide f32 temps: 6 * L * H * 4   (h1/z/p/h1d/dot results —
      these dominate when C << H, so they are accounted explicitly).
    """
    per_ex = 2 * (L * c + 2 * c) * 4 + 6 * L * h * 4
    tb = max(1, budget_bytes // per_ex)
    if b >= 16:
        tb = min(tb, b // 2)          # >=2 grid steps: keep both v7x TCs busy
        tb = max(8, (tb // 8) * 8)    # sublane-aligned (tb, C)/(tb*L, C) blocks
    else:
        tb = b                        # toy batches: one step, blocks = full dims
    return int(tb)


def din_forward(inputs, params, *, tb=None, compute_dtype=jnp.bfloat16,
                vmem_budget_bytes=18 << 20, vmem_limit_bytes=48 << 20):
    """inputs: (B, N, C) float32. Returns (B, 1, 2C) = concat([pooled, query])."""
    b, n, c = inputs.shape
    L = n - 1
    user = inputs[:, :-1, :]       # (B, L, C)
    query = inputs[:, -1:, :]      # (B, 1, C)
    h = params["w1t"].shape[1]

    if tb is None:
        tb = _pick_tb(b, L, c, h, vmem_budget_bytes)
    b_pad = pl.cdiv(b, tb) * tb

    if b_pad != b:
        pad = ((0, b_pad - b), (0, 0), (0, 0))
        user_p = jnp.pad(user, pad)
        query_p = jnp.pad(query, pad)
    else:
        user_p, query_p = user, query

    # Flatten in the wrapper (free, contiguous) so the kernel never reshapes
    # the behaviour tile; cast the streams + folded W1 stack to the compute
    # dtype (bf16 halves HBM traffic and uses the native MXU path; all
    # accumulation stays f32 in-kernel).
    user_flat = user_p.reshape(b_pad * L, c).astype(compute_dtype)
    query_flat = query_p.reshape(b_pad, c).astype(compute_dtype)

    w_stack, vec = _fold_params(params, c)
    w_stack = w_stack.astype(compute_dtype)

    pooled = pl.pallas_call(
        din_attention_kernel,
        out_shape=jax.ShapeDtypeStruct((b_pad, c), jnp.float32),
        grid=(b_pad // tb,),
        in_specs=[
            pl.BlockSpec((tb, c), lambda i: (i, 0)),          # query rows
            # Behaviour stream = dominant HBM traffic.  If profiling shows
            # exposed DMA, add pipeline_mode=pl.Buffered(3) here (and include
            # the third buffer in the v7x VMEM budget).
            pl.BlockSpec((tb * L, c), lambda i: (i, 0)),
            pl.BlockSpec(w_stack.shape, lambda i: (0, 0)),    # folded W1 stack
            pl.BlockSpec(vec.shape, lambda i: (0, 0)),        # packed f32 vectors
        ],
        out_specs=pl.BlockSpec((tb, c), lambda i: (i, 0)),
        compiler_params=pltpu.CompilerParams(
            dimension_semantics=("parallel",),                # megacore / v7x 2-TC
            vmem_limit_bytes=vmem_limit_bytes),
    )(query_flat, user_flat, w_stack, vec)

    pooled = pooled[:b].reshape(b, 1, c)
    # DIN.forward_sequence: concat([pooled_user, query], dim=2) — plain XLA so
    # the kernel does not pass the query through its output stores.
    return jnp.concatenate([pooled, query], axis=-1)


def din_reference(inputs, p):
    """Pure-JAX reference with the original (unfused, eval-mode) semantics."""
    b, n, c = inputs.shape
    user = inputs[:, :-1, :]
    query = inputs[:, -1:, :]
    L = n - 1
    qb = jnp.broadcast_to(query, (b, L, c))
    a_in = jnp.concatenate([qb, user, qb - user, qb * user], axis=-1)   # (B,L,4C)
    h1 = a_in @ p["w1t"] + p["b1"]
    x_hat = (h1 - p["rm"]) * jax.lax.rsqrt(p["rv"] + EPS) * p["gamma"] + p["beta"]
    s = jax.nn.sigmoid(x_hat)
    h1d = p["alpha"] * (1.0 - s) * h1 + s * h1
    h2 = h1d @ p["w2t"] + p["b2"]
    w = h2 @ p["w3t"] + p["b3"]                                         # (B,L,1)
    pooled = jnp.sum(w * user, axis=1, keepdims=True)                   # (B,1,C)
    return jnp.concatenate([pooled, query], axis=-1)


def xavier_normal(key, out_dim, in_dim):
    # matches torch.nn.init.xavier_normal_(gain=1.0) for Linear weight (out, in)
    std = (2.0 / (in_dim + out_dim)) ** 0.5
    return std * jax.random.normal(key, (out_dim, in_dim), dtype=jnp.float32)


def make_params(key, c):
    h1, h2 = 64, 16  # LocalActivationUnit hidden_size=[64, 16]
    ks = jax.random.split(key, 10)
    w1 = xavier_normal(ks[0], h1, 4 * c)   # Linear(4C, 64)
    w2 = xavier_normal(ks[1], h2, h1)      # Linear(64, 16)
    w3 = xavier_normal(ks[2], 1, h2)       # Linear(16, 1)
    nrm = lambda k, s, sc: sc * jax.random.normal(k, s, dtype=jnp.float32)
    return {
        "w1t": w1.T,                                   # (4C, 64)
        "b1": nrm(ks[3], (1, h1), 0.1),
        # Dice(64, dim=3): BatchNorm1d running stats + affine (eval mode)
        "rm": nrm(ks[4], (1, h1), 0.1),
        "rv": jax.random.uniform(ks[5], (1, h1), jnp.float32, 0.5, 1.5),
        "gamma": 1.0 + nrm(ks[6], (1, h1), 0.1),
        "beta": nrm(ks[7], (1, h1), 0.1),
        "alpha": nrm(ks[8], (1, h1), 0.1),
        "w2t": w2.T,                                   # (64, 16)
        "b2": nrm(ks[9], (1, h2), 0.1),
        "w3t": w3.T,                                   # (16, 1)
        "b3": jnp.zeros((1, 1), jnp.float32),
    }


if __name__ == "__main__":
    key = jax.random.PRNGKey(0)
    k_in, k_par = jax.random.split(key)

    # --- small shape: batch=8, seq len 9 (8 behaviours + 1 query), embed=8 ---
    B, N, C = 8, 9, 8
    inputs = jax.random.normal(k_in, (B, N, C), dtype=jnp.float32)
    params = make_params(k_par, C)
    ref = din_reference(inputs, params)

    # exact path (f32 streams): strict check of the algebraic folds.
    out = jax.block_until_ready(
        din_forward(inputs, params, compute_dtype=jnp.float32))
    assert out.shape == (B, 1, 2 * C), out.shape
    assert jnp.allclose(out, ref, rtol=1e-3, atol=1e-3), (
        f"f32 max abs err = {jnp.max(jnp.abs(out - ref))}")

    # --- larger shape: exercises multi-step grid, batch padding, megacore ----
    B2, N2 = 40, 17                      # L=16 -> tb=16, grid of 3, 8 pad rows
    k_in2, _ = jax.random.split(k_in)
    inputs2 = jax.random.normal(k_in2, (B2, N2, C), dtype=jnp.float32)
    ref2 = din_reference(inputs2, params)

    out2 = jax.block_until_ready(
        din_forward(inputs2, params, compute_dtype=jnp.float32))
    assert out2.shape == (B2, 1, 2 * C), out2.shape
    assert jnp.allclose(out2, ref2, rtol=1e-3, atol=1e-3), (
        f"f32(grid) max abs err = {jnp.max(jnp.abs(out2 - ref2))}")

    # default fast path: bf16 streams + bf16 Dice sigmoid, f32 accumulation;
    # checked at a bf16-appropriate tolerance against the f32 reference.
    out2_fast = jax.block_until_ready(din_forward(inputs2, params))
    err = float(jnp.max(jnp.abs(out2_fast - ref2)))
    tol = 0.1 * max(1.0, float(jnp.max(jnp.abs(ref2))))
    assert err <= tol, f"bf16 max abs err = {err} (tol {tol})"

    print("KERNEL_OK")
</pallas_src>

<mosaic_0001>
module attributes {stable_mosaic.version = 11 : i64} {
  func.func @din_attention_kernel(%arg0: i32, %arg1: memref<8x8xf32, #tpu.memory_space<vmem>>, %arg2: memref<64x8xf32, #tpu.memory_space<vmem>>, %arg3: memref<24x64xf32, #tpu.memory_space<vmem>>, %arg4: memref<8x64xf32, #tpu.memory_space<vmem>>, %arg5: memref<8x8xf32, #tpu.memory_space<vmem>>) attributes {dimension_semantics = [#tpu.dimension_semantics<parallel>], iteration_bounds = array<i64: 1>, scalar_prefetch = 0 : i64, scratch_operands = 0 : i64, tpu.core_type = #tpu.core_type<tc>, window_params = [{transform_indices = @transform_0, window_bounds = array<i64: 8, 8>}, {transform_indices = @transform_1, window_bounds = array<i64: 64, 8>}, {pipeline_mode = #tpu.pipeline_mode<synchronous>, transform_indices = @transform_2, window_bounds = array<i64: 24, 64>}, {pipeline_mode = #tpu.pipeline_mode<synchronous>, transform_indices = @transform_3, window_bounds = array<i64: 8, 64>}, {transform_indices = @transform_4, window_bounds = array<i64: 8, 8>}]} {
    %c0 = arith.constant 0 : index
    %c0_0 = arith.constant 0 : index
    %0 = vector.load %arg1[%c0, %c0_0] : memref<8x8xf32, #tpu.memory_space<vmem>>, vector<8x8xf32>
    %c0_1 = arith.constant 0 : index
    %c0_2 = arith.constant 0 : index
    %1 = vector.load %arg2[%c0_1, %c0_2] : memref<64x8xf32, #tpu.memory_space<vmem>>, vector<64x8xf32>
    %2 = vector.shape_cast %0 : vector<8x8xf32> to vector<8x1x8xf32>
    %3 = vector.shape_cast %2 : vector<8x1x8xf32> to vector<8x1x8xf32>
    %4 = vector.broadcast %3 : vector<8x1x8xf32> to vector<8x8x8xf32>
    %5 = vector.shape_cast %4 : vector<8x8x8xf32> to vector<64x8xf32>
    %6 = arith.mulf %1, %5 : vector<64x8xf32>
    %c0_3 = arith.constant 0 : index
    %c0_4 = arith.constant 0 : index
    %7 = vector.load %arg3[%c0_3, %c0_4] : memref<24x64xf32, #tpu.memory_space<vmem>>, vector<8x64xf32>
    %c8 = arith.constant 8 : index
    %c0_5 = arith.constant 0 : index
    %8 = vector.load %arg3[%c8, %c0_5] : memref<24x64xf32, #tpu.memory_space<vmem>>, vector<8x64xf32>
    %c16 = arith.constant 16 : index
    %c0_6 = arith.constant 0 : index
    %9 = vector.load %arg3[%c16, %c0_6] : memref<24x64xf32, #tpu.memory_space<vmem>>, vector<8x64xf32>
    %c0_7 = arith.constant 0 : index
    %c0_8 = arith.constant 0 : index
    %10 = vector.load %arg4[%c0_7, %c0_8] : memref<8x64xf32, #tpu.memory_space<vmem>>, vector<1x64xf32>
    %c1 = arith.constant 1 : index
    %c0_9 = arith.constant 0 : index
    %11 = vector.load %arg4[%c1, %c0_9] : memref<8x64xf32, #tpu.memory_space<vmem>>, vector<1x64xf32>
    %c2 = arith.constant 2 : index
    %c0_10 = arith.constant 0 : index
    %12 = vector.load %arg4[%c2, %c0_10] : memref<8x64xf32, #tpu.memory_space<vmem>>, vector<1x64xf32>
    %c3 = arith.constant 3 : index
    %c0_11 = arith.constant 0 : index
    %13 = vector.load %arg4[%c3, %c0_11] : memref<8x64xf32, #tpu.memory_space<vmem>>, vector<1x64xf32>
    %c4 = arith.constant 4 : index
    %c0_12 = arith.constant 0 : index
    %14 = vector.load %arg4[%c4, %c0_12] : memref<8x64xf32, #tpu.memory_space<vmem>>, vector<1x64xf32>
    %c5 = arith.constant 5 : index
    %c0_13 = arith.constant 0 : index
    %15 = vector.load %arg4[%c5, %c0_13] : memref<8x64xf32, #tpu.memory_space<vmem>>, vector<1x1xf32>
    %cst = arith.constant dense<0.000000e+00> : vector<64x64xf32>
    %16 = tpu.matmul %1, %8, %cst {dimension_numbers = #tpu.dot_dimension_numbers<[1], [0], [0], [1], [0, 0, 1, 1], [], []>} : vector<64x8xf32>, vector<8x64xf32>, vector<64x64xf32> -> vector<64x64xf32>
    %cst_14 = arith.constant dense<0.000000e+00> : vector<64x64xf32>
    %17 = tpu.matmul %6, %9, %cst_14 {dimension_numbers = #tpu.dot_dimension_numbers<[1], [0], [0], [1], [0, 0, 1, 1], [], []>} : vector<64x8xf32>, vector<8x64xf32>, vector<64x64xf32> -> vector<64x64xf32>
    %18 = arith.addf %16, %17 : vector<64x64xf32>
    %cst_15 = arith.constant dense<0.000000e+00> : vector<64x64xf32>
    %19 = tpu.matmul %5, %7, %cst_15 {dimension_numbers = #tpu.dot_dimension_numbers<[1], [0], [0], [1], [0, 0, 1, 1], [], []>} : vector<64x8xf32>, vector<8x64xf32>, vector<64x64xf32> -> vector<64x64xf32>
    %20 = arith.addf %18, %19 : vector<64x64xf32>
    %21 = vector.broadcast %10 : vector<1x64xf32> to vector<64x64xf32>
    %22 = arith.addf %20, %21 : vector<64x64xf32>
    %23 = vector.broadcast %11 : vector<1x64xf32> to vector<64x64xf32>
    %24 = arith.mulf %22, %23 : vector<64x64xf32>
    %25 = vector.broadcast %12 : vector<1x64xf32> to vector<64x64xf32>
    %26 = arith.addf %24, %25 : vector<64x64xf32>
    %27 = arith.negf %26 : vector<64x64xf32>
    %28 = math.exp %27 : vector<64x64xf32>
    %cst_16 = arith.constant 1.000000e+00 : f32
    %29 = vector.broadcast %cst_16 : f32 to vector<64x64xf32>
    %30 = arith.addf %29, %28 : vector<64x64xf32>
    %31 = arith.divf %29, %30 : vector<64x64xf32>
    %cst_17 = arith.constant 1.000000e+00 : f32
    %32 = vector.broadcast %cst_17 : f32 to vector<1x64xf32>
    %33 = arith.subf %32, %13 : vector<1x64xf32>
    %34 = vector.broadcast %33 : vector<1x64xf32> to vector<64x64xf32>
    %35 = arith.mulf %31, %34 : vector<64x64xf32>
    %36 = vector.broadcast %13 : vector<1x64xf32> to vector<64x64xf32>
    %37 = arith.addf %36, %35 : vector<64x64xf32>
    %38 = arith.mulf %22, %37 : vector<64x64xf32>
    %39 = vector.broadcast %14 : vector<1x64xf32> to vector<64x64xf32>
    %40 = arith.mulf %38, %39 : vector<64x64xf32>
    %cst_18 = arith.constant dense<0.000000e+00> : vector<64xf32>
    %41 = vector.multi_reduction <add>, %40, %cst_18 [1] : vector<64x64xf32> to vector<64xf32>
    %42 = vector.shape_cast %41 : vector<64xf32> to vector<64x1xf32>
    %43 = vector.broadcast %15 : vector<1x1xf32> to vector<64x1xf32>
    %44 = arith.addf %42, %43 : vector<64x1xf32>
    %45 = vector.broadcast %44 : vector<64x1xf32> to vector<64x8xf32>
    %46 = arith.mulf %45, %1 : vector<64x8xf32>
    %47 = vector.shape_cast %46 : vector<64x8xf32> to vector<8x8x8xf32>
    %cst_19 = arith.constant dense<0.000000e+00> : vector<8x8xf32>
    %48 = vector.multi_reduction <add>, %47, %cst_19 [1] : vector<8x8x8xf32> to vector<8x8xf32>
    %c0_20 = arith.constant 0 : index
    %c0_21 = arith.constant 0 : index
    %49 = vector.load %arg5[%c0_20, %c0_21] : memref<8x8xf32, #tpu.memory_space<vmem>>, vector<8x8xf32>
    tpu.vector_store %arg5[%c0_20, %c0_21], %48 {strides = array<i32>} : memref<8x8xf32, #tpu.memory_space<vmem>>, vector<8x8xf32>,
    return
  }
  func.func @transform_0(%arg0: i32) -> (i32, i32) {
    %c0_i32 = arith.constant 0 : i32
    %c0_i32_0 = arith.constant 0 : i32
    return %arg0, %c0_i32 : i32, i32
  }
  func.func @transform_1(%arg0: i32) -> (i32, i32) {
    %c0_i32 = arith.constant 0 : i32
    %c0_i32_0 = arith.constant 0 : i32
    return %arg0, %c0_i32 : i32, i32
  }
  func.func @transform_2(%arg0: i32) -> (i32, i32) {
    %c0_i32 = arith.constant 0 : i32
    %c0_i32_0 = arith.constant 0 : i32
    %c0_i32_1 = arith.constant 0 : i32
    return %c0_i32, %c0_i32_0 : i32, i32
  }
  func.func @transform_3(%arg0: i32) -> (i32, i32) {
    %c0_i32 = arith.constant 0 : i32
    %c0_i32_0 = arith.constant 0 : i32
    %c0_i32_1 = arith.constant 0 : i32
    return %c0_i32, %c0_i32_0 : i32, i32
  }
  func.func @transform_4(%arg0: i32) -> (i32, i32) {
    %c0_i32 = arith.constant 0 : i32
    %c0_i32_0 = arith.constant 0 : i32
    return %arg0, %c0_i32 : i32, i32
  }
}

</mosaic_0001>

<llo_original>
// kernel: tpu_custom_call.1
$region0: #{tpu_custom_call.1}
  #allocation0 [shape = 'u32[]', space=smem, size = 0x4, offset = 0x4, fixed_abs, tag = 'smem constant byte address 0x4 - core index']
  #allocation1 [shape = 'u32[144,128]{1,0:T(1,128)}', space=vmem, size = 0x12000, scoped, tag = 'internal scratch']
  %s0 = inlined_call_operand.vmem [shape: f32[8,8], index: 0, kind: input, shape index: {}]
  %s1 = inlined_call_operand.vmem [shape: f32[64,8], index: 1, kind: input, shape index: {}]
  %s2 = inlined_call_operand.vmem [shape: f32[24,64], index: 2, kind: input, shape index: {}]
  %s3 = inlined_call_operand.vmem [shape: f32[8,64], index: 3, kind: input, shape index: {}]
  %s4 = inlined_call_operand.hbm [shape: f32[8,8], index: 4, kind: output, shape index: {}]
  %s5 = sld [smem:[#allocation0]]
  $region26: #{tpu_custom_call.1} parent=0
    _
  %s7 = ssub.s32 1, %s5
  %s8 = scalar_select 0, %s7, %s5
  $region1: #{tpu_custom_call.1} parent=0
    #allocation2 [shape = 'u8[4096]{0}', space=vmem, size = 0x1000, scoped, tag = 'output window, operand 0, single buffered']
    #allocation3 [shape = 's32[1]{0}', space=sflag, size = 0x4, scoped, tag = 'scoped memory for tpu_custom_call.1']
    %9 = vsyncpa [#allocation3], 0
    // Predicated region
    $region2: #{tpu_custom_call.1} parent=1 // pred_check
      _
    $region3: #{tpu_custom_call.1} parent=1 // pred_check_branch
      %11 = sbr.rel (0) target = $region5
    $region4: #{tpu_custom_call.1} parent=1 // pred_region
      _
    $region5: #{tpu_custom_call.1} parent=1 // pred_fallthru
      _
    // Predicated region
    $region6: #{tpu_custom_call.1} parent=1 // pred_check
      _
    $region7: #{tpu_custom_call.1} parent=1 // pred_check_branch
      %13 = sbr.rel (0) target = $region9
    $region8: #{tpu_custom_call.1} parent=1 // pred_region
      _
    $region9: #{tpu_custom_call.1} parent=1 // pred_fallthru
      _
    // Predicated region
    $region10: #{tpu_custom_call.1} parent=1 // pred_check
      _
    $region11: #{tpu_custom_call.1} parent=1 // pred_check_branch
      %15 = sbr.rel (0) target = $region13
    $region12: #{tpu_custom_call.1} parent=1 // pred_region
      _
    $region13: #{tpu_custom_call.1} parent=1 // pred_fallthru
      _
    // Predicated region
    $region14: #{tpu_custom_call.1} parent=1 // pred_check
      _
    $region15: #{tpu_custom_call.1} parent=1 // pred_check_branch
      %17 = sbr.rel (0) target = $region17
    $region16: #{tpu_custom_call.1} parent=1 // pred_region
      _
    $region17: #{tpu_custom_call.1} parent=1 // pred_fallthru
      _
    %v18 = vld [vmem:[%s0] sm:$0xff]
    %v19 = vld [vmem:[%s1] sm:$0xff]
    %v20 = vld [vmem:[%s1 + $0x8] sm:$0xff]
    %v21 = vld [vmem:[%s1 + $0x10] sm:$0xff]
    %v22 = vld [vmem:[%s1 + $0x18] sm:$0xff]
    %v23 = vld [vmem:[%s1 + $0x20] sm:$0xff]
    %v24 = vld [vmem:[%s1 + $0x28] sm:$0xff]
    %v25 = vld [vmem:[%s1 + $0x30] sm:$0xff]
    %v26 = vld [vmem:[%s1 + $0x38] sm:$0xff]
    %v28 = vcombine.high %v18, %v18
    %v30 = vunpack.c.l.s4 1966171168
    %v31 = vunpack.c.0.s8 %v30
    %v32 = vlaneseq
    %v33 = vshrl.u32 %v32, 7
    %v34 = vsub.s32 %v31, %v33
    %v35 = vrot.slane %v18, %v34
    %v37 = vunpack.c.l.s4 1966171168
    %v38 = vunpack.c.0.s8 %v37
    %v39 = vlaneseq
    %v40 = vshrl.u32 %v39, 7
    %v41 = vsub.s32 %v38, %v40
    %v42 = vrot.slane %v28, %v41
    %v43 = vcombine.high %v35, %v35
    %v44 = vcombine.high %v42, %v42
    %v46 = vunpack.c.l.s4 1966171168
    %v47 = vunpack.c.0.s8 %v46
    %v48 = vlaneseq
    %v49 = vshrl.u32 %v48, 7
    %v50 = vsub.s32 %v47, %v49
    %v51 = vrot.slane %v35, %v50
    %v53 = vunpack.c.l.s4 1966171168
    %v54 = vunpack.c.0.s8 %v53
    %v55 = vlaneseq
    %v56 = vshrl.u32 %v55, 7
    %v57 = vsub.s32 %v54, %v56
    %v58 = vrot.slane %v42, %v57
    %v60 = vunpack.c.l.s4 1966171168
    %v61 = vunpack.c.0.s8 %v60
    %v62 = vlaneseq
    %v63 = vshrl.u32 %v62, 7
    %v64 = vsub.s32 %v61, %v63
    %v65 = vrot.slane %v43, %v64
    %v67 = vunpack.c.l.s4 1966171168
    %v68 = vunpack.c.0.s8 %v67
    %v69 = vlaneseq
    %v70 = vshrl.u32 %v69, 7
    %v71 = vsub.s32 %v68, %v70
    %v72 = vrot.slane %v44, %v71
    %v73 = vcombine.high %v51, %v51
    %v74 = vcombine.high %v58, %v58
    %v75 = vcombine.high %v65, %v65
    %v76 = vcombine.high %v72, %v72
    %v77 = vlaneseq
    %v78 = vshrl.u32 %v77, 7
    %v79 = vsub.s32 0, %v78
    %v80 = vrot.slane %v51, %v79
    %v81 = vlaneseq
    %v82 = vshrl.u32 %v81, 7
    %v83 = vsub.s32 0, %v82
    %v84 = vrot.slane %v65, %v83
    %v85 = vlaneseq
    %v86 = vshrl.u32 %v85, 7
    %v87 = vsub.s32 0, %v86
    %v88 = vrot.slane %v73, %v87
    %v89 = vlaneseq
    %v90 = vshrl.u32 %v89, 7
    %v91 = vsub.s32 0, %v90
    %v92 = vrot.slane %v75, %v91
    %v93 = vlaneseq
    %v94 = vshrl.u32 %v93, 7
    %v95 = vsub.s32 0, %v94
    %v96 = vrot.slane %v58, %v95
    %v97 = vlaneseq
    %v98 = vshrl.u32 %v97, 7
    %v99 = vsub.s32 0, %v98
    %v100 = vrot.slane %v72, %v99
    %v101 = vlaneseq
    %v102 = vshrl.u32 %v101, 7
    %v103 = vsub.s32 0, %v102
    %v104 = vrot.slane %v74, %v103
    %v105 = vlaneseq
    %v106 = vshrl.u32 %v105, 7
    %v107 = vsub.s32 0, %v106
    %v108 = vrot.slane %v76, %v107
    %v117 = vmul.f32 %v19, %v80
    %v118 = vmul.f32 %v20, %v84
    %v119 = vmul.f32 %v21, %v88
    %v120 = vmul.f32 %v22, %v92
    %v121 = vmul.f32 %v23, %v96
    %v122 = vmul.f32 %v24, %v100
    %v123 = vmul.f32 %v25, %v104
    %v124 = vmul.f32 %v26, %v108
    %v125 = vld [vmem:[%s2] sm:$0xff]
    %v126 = vld [vmem:[%s2 + $0x8] sm:$0xff]
    %v127 = vld [vmem:[%s2 + $0x10] sm:$0xff]
    %v128 = vld [vmem:[%s3] sm:$0x1]
    %v129 = vld [vmem:[%s3 + $0x1] sm:$0x1]
    %v130 = vld [vmem:[%s3 + $0x2] sm:$0x1]
    %v131 = vld [vmem:[%s3 + $0x3] sm:$0x1]
    %v132 = vld [vmem:[%s3 + $0x4] sm:$0x1]
    %v133 = vld [vmem:[%s3 + $0x5] sm:$0x1]
    %vm134 = vcmask 64512
    %v136 = vsel %vm134, %v117, 0
    %v139 = vsel %vm134, %v118, 0
    %v142 = vsel %vm134, %v119, 0
    %v145 = vsel %vm134, %v120, 0
    %v148 = vsel %vm134, %v121, 0
    %v151 = vsel %vm134, %v122, 0
    %v154 = vsel %vm134, %v123, 0
    %v157 = vsel %vm134, %v124, 0
    %159 = vmatprep.subr.mxu0 0.0
    %160 = vmatpush1.msra.mxu0 %v127
    %161 = vmatprep.subr.mxu0 0.0
    %162 = vmatpush1.msra.mxu0 0.0
    %163 = vmatprep.subr.mxu0 0.0
    %164 = vmatpush1.msra.mxu0 0.0
    %165 = vmatprep.subr.mxu0 0.0
    %166 = vmatpush1.msra.mxu0 0.0
    %167 = vmatprep.subr.mxu0 0.0
    %168 = vmatpush1.msra.mxu0 0.0
    %169 = vmatprep.subr.mxu0 0.0
    %170 = vmatpush1.msra.mxu0 0.0
    %171 = vmatprep.subr.mxu0 0.0
    %172 = vmatpush1.msra.mxu0 0.0
    %173 = vmatprep.subr.mxu0 0.0
    %174 = vmatpush1.msra.mxu0 0.0
    %175 = vmatprep.subr.mxu0 0.0
    %176 = vmatpush1.msra.mxu0 0.0
    %177 = vmatprep.subr.mxu0 0.0
    %178 = vmatpush1.msra.mxu0 0.0
    %179 = vmatprep.subr.mxu0 0.0
    %180 = vmatpush1.msra.mxu0 0.0
    %181 = vmatprep.subr.mxu0 0.0
    %182 = vmatpush1.msra.mxu0 0.0
    %183 = vmatprep.subr.mxu0 0.0
    %184 = vmatpush1.msra.mxu0 0.0
    %185 = vmatprep.subr.mxu0 0.0
    %186 = vmatpush1.msra.mxu0 0.0
    %187 = vmatprep.subr.mxu0 0.0
    %188 = vmatpush1.msra.mxu0 0.0
    %189 = vmatprep.subr.mxu0 0.0
    %190 = vmatpush1.msra.mxu0 0.0
    %191 = vmatprep.subr.mxu0 0.0
    %192 = vmatpush1.msra.mxu0 0.0
    %193 = vmatprep.subr.mxu0 0.0
    %194 = vmatpush1.msra.mxu0 0.0
    %195 = vmatprep.subr.mxu0 0.0
    %196 = vmatpush1.msra.mxu0 0.0
    %197 = vmatprep.subr.mxu0 0.0
    %198 = vmatpush1.msra.mxu0 0.0
    %199 = vmatprep.subr.mxu0 0.0
    %200 = vmatpush1.msra.mxu0 0.0
    %201 = vmatprep.subr.mxu0 0.0
    %202 = vmatpush1.msra.mxu0 0.0
    %203 = vmatprep.subr.mxu0 0.0
    %204 = vmatpush1.msra.mxu0 0.0
    %205 = vmatprep.subr.mxu0 0.0
    %206 = vmatpush1.msra.mxu0 0.0
    %207 = vmatprep.subr.mxu0 0.0
    %208 = vmatpush1.msra.mxu0 0.0
    %209 = vmatprep.subr.mxu0 0.0
    %210 = vmatpush1.msra.mxu0 0.0
    %211 = vmatprep.subr.mxu0 0.0
    %212 = vmatpush1.msra.mxu0 0.0
    %213 = vmatprep.subr.mxu0 0.0
    %214 = vmatpush1.msra.mxu0 0.0
    %215 = vmatprep.subr.mxu0 0.0
    %216 = vmatpush1.msra.mxu0 0.0
    %217 = vmatprep.subr.mxu0 0.0
    %218 = vmatpush1.msra.mxu0 0.0
    %219 = vmatprep.subr.mxu0 0.0
    %220 = vmatpush1.msra.mxu0 0.0
    %221 = vmatprep.subr.mxu0 0.0
    %222 = vmatpush1.msra.mxu0 0.0
    %223 = vmatprep.mubr.f32.mxu0 0.0
    %224 = vmatmul.mubr.f32.gmra.mrb[0].mxu0 %v136
    %v225 = vpop.f32.mrb[0].mxu0
    %v226 = vadd.f32 0.0, %v225
    %v227 = vpop.f32.mrb[0].mxu0
    %228 = vmatprep.mubr.f32.mxu0 0.0
    %229 = vmatmul.mubr.f32.gmra.mrb[0].mxu0 %v139
    %v230 = vpop.f32.mrb[0].mxu0
    %v231 = vadd.f32 0.0, %v230
    %v232 = vpop.f32.mrb[0].mxu0
    %233 = vmatprep.mubr.f32.mxu0 0.0
    %234 = vmatmul.mubr.f32.gmra.mrb[0].mxu0 %v142
    %v235 = vpop.f32.mrb[0].mxu0
    %v236 = vadd.f32 0.0, %v235
    %v237 = vpop.f32.mrb[0].mxu0
    %238 = vmatprep.mubr.f32.mxu0 0.0
    %239 = vmatmul.mubr.f32.gmra.mrb[0].mxu0 %v145
    %v240 = vpop.f32.mrb[0].mxu0
    %v241 = vadd.f32 0.0, %v240
    %v242 = vpop.f32.mrb[0].mxu0
    %243 = vmatprep.mubr.f32.mxu0 0.0
    %244 = vmatmul.mubr.f32.gmra.mrb[0].mxu0 %v148
    %v245 = vpop.f32.mrb[0].mxu0
    %v246 = vadd.f32 0.0, %v245
    %v247 = vpop.f32.mrb[0].mxu0
    %248 = vmatprep.mubr.f32.mxu0 0.0
    %249 = vmatmul.mubr.f32.gmra.mrb[0].mxu0 %v151
    %v250 = vpop.f32.mrb[0].mxu0
    %v251 = vadd.f32 0.0, %v250
    %v252 = vpop.f32.mrb[0].mxu0
    %253 = vmatprep.mubr.f32.mxu0 0.0
    %254 = vmatmul.mubr.f32.gmra.mrb[0].mxu0 %v154
    %v255 = vpop.f32.mrb[0].mxu0
    %v256 = vadd.f32 0.0, %v255
    %v257 = vpop.f32.mrb[0].mxu0
    %258 = vmatprep.mubr.f32.mxu0 0.0
    %259 = vmatmul.mubr.f32.gmra.mrb[0].mxu0 %v157
    %v260 = vpop.f32.mrb[0].mxu0
    %v261 = vadd.f32 0.0, %v260
    %v262 = vpop.f32.mrb[0].mxu0
    %263 = vdwg.mxu0
    %v265 = vsel %vm134, %v19, 0
    %v268 = vsel %vm134, %v20, 0
    %v271 = vsel %vm134, %v21, 0
    %v274 = vsel %vm134, %v22, 0
    %v277 = vsel %vm134, %v23, 0
    %v280 = vsel %vm134, %v24, 0
    %v283 = vsel %vm134, %v25, 0
    %v286 = vsel %vm134, %v26, 0
    %288 = vmatprep.subr.mxu0 0.0
    %289 = vmatpush1.msra.mxu0 %v126
    %290 = vmatprep.subr.mxu0 0.0
    %291 = vmatpush1.msra.mxu0 0.0
    %292 = vmatprep.subr.mxu0 0.0
    %293 = vmatpush1.msra.mxu0 0.0
    %294 = vmatprep.subr.mxu0 0.0
    %295 = vmatpush1.msra.mxu0 0.0
    %296 = vmatprep.subr.mxu0 0.0
    %297 = vmatpush1.msra.mxu0 0.0
    %298 = vmatprep.subr.mxu0 0.0
    %299 = vmatpush1.msra.mxu0 0.0
    %300 = vmatprep.subr.mxu0 0.0
    %301 = vmatpush1.msra.mxu0 0.0
    %302 = vmatprep.subr.mxu0 0.0
    %303 = vmatpush1.msra.mxu0 0.0
    %304 = vmatprep.subr.mxu0 0.0
    %305 = vmatpush1.msra.mxu0 0.0
    %306 = vmatprep.subr.mxu0 0.0
    %307 = vmatpush1.msra.mxu0 0.0
    %308 = vmatprep.subr.mxu0 0.0
    %309 = vmatpush1.msra.mxu0 0.0
    %310 = vmatprep.subr.mxu0 0.0
    %311 = vmatpush1.msra.mxu0 0.0
    %312 = vmatprep.subr.mxu0 0.0
    %313 = vmatpush1.msra.mxu0 0.0
    %314 = vmatprep.subr.mxu0 0.0
    %315 = vmatpush1.msra.mxu0 0.0
    %316 = vmatprep.subr.mxu0 0.0
    %317 = vmatpush1.msra.mxu0 0.0
    %318 = vmatprep.subr.mxu0 0.0
    %319 = vmatpush1.msra.mxu0 0.0
    %320 = vmatprep.subr.mxu0 0.0
    %321 = vmatpush1.msra.mxu0 0.0
    %322 = vmatprep.subr.mxu0 0.0
    %323 = vmatpush1.msra.mxu0 0.0
    %324 = vmatprep.subr.mxu0 0.0
    %325 = vmatpush1.msra.mxu0 0.0
    %326 = vmatprep.subr.mxu0 0.0
    %327 = vmatpush1.msra.mxu0 0.0
    %328 = vmatprep.subr.mxu0 0.0
    %329 = vmatpush1.msra.mxu0 0.0
    %330 = vmatprep.subr.mxu0 0.0
    %331 = vmatpush1.msra.mxu0 0.0
    %332 = vmatprep.subr.mxu0 0.0
    %333 = vmatpush1.msra.mxu0 0.0
    %334 = vmatprep.subr.mxu0 0.0
    %335 = vmatpush1.msra.mxu0 0.0
    %336 = vmatprep.subr.mxu0 0.0
    %337 = vmatpush1.msra.mxu0 0.0
    %338 = vmatprep.subr.mxu0 0.0
    %339 = vmatpush1.msra.mxu0 0.0
    %340 = vmatprep.subr.mxu0 0.0
    %341 = vmatpush1.msra.mxu0 0.0
    %342 = vmatprep.subr.mxu0 0.0
    %343 = vmatpush1.msra.mxu0 0.0
    %344 = vmatprep.subr.mxu0 0.0
    %345 = vmatpush1.msra.mxu0 0.0
    %346 = vmatprep.subr.mxu0 0.0
    %347 = vmatpush1.msra.mxu0 0.0
    %348 = vmatprep.subr.mxu0 0.0
    %349 = vmatpush1.msra.mxu0 0.0
    %350 = vmatprep.subr.mxu0 0.0
    %351 = vmatpush1.msra.mxu0 0.0
    %352 = vmatprep.mubr.f32.mxu0 0.0
    %353 = vmatmul.mubr.f32.gmra.mrb[0].mxu0 %v265
    %v354 = vpop.f32.mrb[0].mxu0
    %v355 = vadd.f32 %v226, %v354
    %v356 = vpop.f32.mrb[0].mxu0
    %357 = vmatprep.mubr.f32.mxu0 0.0
    %358 = vmatmul.mubr.f32.gmra.mrb[0].mxu0 %v268
    %v359 = vpop.f32.mrb[0].mxu0
    %v360 = vadd.f32 %v231, %v359
    %v361 = vpop.f32.mrb[0].mxu0
    %362 = vmatprep.mubr.f32.mxu0 0.0
    %363 = vmatmul.mubr.f32.gmra.mrb[0].mxu0 %v271
    %v364 = vpop.f32.mrb[0].mxu0
    %v365 = vadd.f32 %v236, %v364
    %v366 = vpop.f32.mrb[0].mxu0
    %367 = vmatprep.mubr.f32.mxu0 0.0
    %368 = vmatmul.mubr.f32.gmra.mrb[0].mxu0 %v274
    %v369 = vpop.f32.mrb[0].mxu0
    %v370 = vadd.f32 %v241, %v369
    %v371 = vpop.f32.mrb[0].mxu0
    %372 = vmatprep.mubr.f32.mxu0 0.0
    %373 = vmatmul.mubr.f32.gmra.mrb[0].mxu0 %v277
    %v374 = vpop.f32.mrb[0].mxu0
    %v375 = vadd.f32 %v246, %v374
    %v376 = vpop.f32.mrb[0].mxu0
    %377 = vmatprep.mubr.f32.mxu0 0.0
    %378 = vmatmul.mubr.f32.gmra.mrb[0].mxu0 %v280
    %v379 = vpop.f32.mrb[0].mxu0
    %v380 = vadd.f32 %v251, %v379
    %v381 = vpop.f32.mrb[0].mxu0
    %382 = vmatprep.mubr.f32.mxu0 0.0
    %383 = vmatmul.mubr.f32.gmra.mrb[0].mxu0 %v283
    %v384 = vpop.f32.mrb[0].mxu0
    %v385 = vadd.f32 %v256, %v384
    %v386 = vpop.f32.mrb[0].mxu0
    %387 = vmatprep.mubr.f32.mxu0 0.0
    %388 = vmatmul.mubr.f32.gmra.mrb[0].mxu0 %v286
    %v389 = vpop.f32.mrb[0].mxu0
    %v390 = vadd.f32 %v261, %v389
    %v391 = vpop.f32.mrb[0].mxu0
    %392 = vdwg.mxu0
    %v393 = vsel %vm134, %v80, 0
    %v395 = vsel %vm134, %v84, 0
    %v397 = vsel %vm134, %v88, 0
    %v399 = vsel %vm134, %v92, 0
    %v401 = vsel %vm134, %v96, 0
    %v403 = vsel %vm134, %v100, 0
    %v405 = vsel %vm134, %v104, 0
    %v407 = vsel %vm134, %v108, 0
    %409 = vmatprep.subr.mxu0 0.0
    %410 = vmatpush1.msra.mxu0 %v125
    %411 = vmatprep.subr.mxu0 0.0
    %412 = vmatpush1.msra.mxu0 0.0
    %413 = vmatprep.subr.mxu0 0.0
    %414 = vmatpush1.msra.mxu0 0.0
    %415 = vmatprep.subr.mxu0 0.0
    %416 = vmatpush1.msra.mxu0 0.0
    %417 = vmatprep.subr.mxu0 0.0
    %418 = vmatpush1.msra.mxu0 0.0
    %419 = vmatprep.subr.mxu0 0.0
    %420 = vmatpush1.msra.mxu0 0.0
    %421 = vmatprep.subr.mxu0 0.0
    %422 = vmatpush1.msra.mxu0 0.0
    %423 = vmatprep.subr.mxu0 0.0
    %424 = vmatpush1.msra.mxu0 0.0
    %425 = vmatprep.subr.mxu0 0.0
    %426 = vmatpush1.msra.mxu0 0.0
    %427 = vmatprep.subr.mxu0 0.0
    %428 = vmatpush1.msra.mxu0 0.0
    %429 = vmatprep.subr.mxu0 0.0
    %430 = vmatpush1.msra.mxu0 0.0
    %431 = vmatprep.subr.mxu0 0.0
    %432 = vmatpush1.msra.mxu0 0.0
    %433 = vmatprep.subr.mxu0 0.0
    %434 = vmatpush1.msra.mxu0 0.0
    %435 = vmatprep.subr.mxu0 0.0
    %436 = vmatpush1.msra.mxu0 0.0
    %437 = vmatprep.subr.mxu0 0.0
    %438 = vmatpush1.msra.mxu0 0.0
    %439 = vmatprep.subr.mxu0 0.0
    %440 = vmatpush1.msra.mxu0 0.0
    %441 = vmatprep.subr.mxu0 0.0
    %442 = vmatpush1.msra.mxu0 0.0
    %443 = vmatprep.subr.mxu0 0.0
    %444 = vmatpush1.msra.mxu0 0.0
    %445 = vmatprep.subr.mxu0 0.0
    %446 = vmatpush1.msra.mxu0 0.0
    %447 = vmatprep.subr.mxu0 0.0
    %448 = vmatpush1.msra.mxu0 0.0
    %449 = vmatprep.subr.mxu0 0.0
    %450 = vmatpush1.msra.mxu0 0.0
    %451 = vmatprep.subr.mxu0 0.0
    %452 = vmatpush1.msra.mxu0 0.0
    %453 = vmatprep.subr.mxu0 0.0
    %454 = vmatpush1.msra.mxu0 0.0
    %455 = vmatprep.subr.mxu0 0.0
    %456 = vmatpush1.msra.mxu0 0.0
    %457 = vmatprep.subr.mxu0 0.0
    %458 = vmatpush1.msra.mxu0 0.0
    %459 = vmatprep.subr.mxu0 0.0
    %460 = vmatpush1.msra.mxu0 0.0
    %461 = vmatprep.subr.mxu0 0.0
    %462 = vmatpush1.msra.mxu0 0.0
    %463 = vmatprep.subr.mxu0 0.0
    %464 = vmatpush1.msra.mxu0 0.0
    %465 = vmatprep.subr.mxu0 0.0
    %466 = vmatpush1.msra.mxu0 0.0
    %467 = vmatprep.subr.mxu0 0.0
    %468 = vmatpush1.msra.mxu0 0.0
    %469 = vmatprep.subr.mxu0 0.0
    %470 = vmatpush1.msra.mxu0 0.0
    %471 = vmatprep.subr.mxu0 0.0
    %472 = vmatpush1.msra.mxu0 0.0
    %473 = vmatprep.mubr.f32.mxu0 0.0
    %474 = vmatmul.mubr.f32.gmra.mrb[0].mxu0 %v393
    %v475 = vpop.f32.mrb[0].mxu0
    %v476 = vadd.f32 0.0, %v475
    %v477 = vpop.f32.mrb[0].mxu0
    %478 = vmatprep.mubr.f32.mxu0 0.0
    %479 = vmatmul.mubr.f32.gmra.mrb[0].mxu0 %v395
    %v480 = vpop.f32.mrb[0].mxu0
    %v481 = vadd.f32 0.0, %v480
    %v482 = vpop.f32.mrb[0].mxu0
    %483 = vmatprep.mubr.f32.mxu0 0.0
    %484 = vmatmul.mubr.f32.gmra.mrb[0].mxu0 %v397
    %v485 = vpop.f32.mrb[0].mxu0
    %v486 = vadd.f32 0.0, %v485
    %v487 = vpop.f32.mrb[0].mxu0
    %488 = vmatprep.mubr.f32.mxu0 0.0
    %489 = vmatmul.mubr.f32.gmra.mrb[0].mxu0 %v399
    %v490 = vpop.f32.mrb[0].mxu0
    %v491 = vadd.f32 0.0, %v490
    %v492 = vpop.f32.mrb[0].mxu0
    %493 = vmatprep.mubr.f32.mxu0 0.0
    %494 = vmatmul.mubr.f32.gmra.mrb[0].mxu0 %v401
    %v495 = vpop.f32.mrb[0].mxu0
    %v496 = vadd.f32 0.0, %v495
    %v497 = vpop.f32.mrb[0].mxu0
    %498 = vmatprep.mubr.f32.mxu0 0.0
    %499 = vmatmul.mubr.f32.gmra.mrb[0].mxu0 %v403
    %v500 = vpop.f32.mrb[0].mxu0
    %v501 = vadd.f32 0.0, %v500
    %v502 = vpop.f32.mrb[0].mxu0
    %503 = vmatprep.mubr.f32.mxu0 0.0
    %504 = vmatmul.mubr.f32.gmra.mrb[0].mxu0 %v405
    %v505 = vpop.f32.mrb[0].mxu0
    %v506 = vadd.f32 0.0, %v505
    %v507 = vpop.f32.mrb[0].mxu0
    %508 = vmatprep.mubr.f32.mxu0 0.0
    %509 = vmatmul.mubr.f32.gmra.mrb[0].mxu0 %v407
    %v510 = vpop.f32.mrb[0].mxu0
    %v511 = vadd.f32 0.0, %v510
    %v512 = vpop.f32.mrb[0].mxu0
    %513 = vdwg.mxu0
    %v514 = vadd.f32 %v355, %v476
    %v515 = vadd.f32 %v360, %v481
    %v516 = vadd.f32 %v365, %v486
    %v517 = vadd.f32 %v370, %v491
    %v518 = vadd.f32 %v375, %v496
    %v519 = vadd.f32 %v380, %v501
    %v520 = vadd.f32 %v385, %v506
    %v521 = vadd.f32 %v390, %v511
    %v522 = vlaneseq
    %v523 = vshrl.u32 %v522, 7
    %v524 = vsub.s32 0, %v523
    %v525 = vrot.slane %v128, %v524
    %v526 = vadd.f32 %v514, %v525
    %v527 = vadd.f32 %v515, %v525
    %v528 = vadd.f32 %v516, %v525
    %v529 = vadd.f32 %v517, %v525
    %v530 = vadd.f32 %v518, %v525
    %v531 = vadd.f32 %v519, %v525
    %v532 = vadd.f32 %v520, %v525
    %v533 = vadd.f32 %v521, %v525
    %v534 = vlaneseq
    %v535 = vshrl.u32 %v534, 7
    %v536 = vsub.s32 0, %v535
    %v537 = vrot.slane %v129, %v536
    %v538 = vmul.f32 %v526, %v537
    %v539 = vmul.f32 %v527, %v537
    %v540 = vmul.f32 %v528, %v537
    %v541 = vmul.f32 %v529, %v537
    %v542 = vmul.f32 %v530, %v537
    %v543 = vmul.f32 %v531, %v537
    %v544 = vmul.f32 %v532, %v537
    %v545 = vmul.f32 %v533, %v537
    %v546 = vlaneseq
    %v547 = vshrl.u32 %v546, 7
    %v548 = vsub.s32 0, %v547
    %v549 = vrot.slane %v130, %v548
    %v550 = vadd.f32 %v538, %v549
    %v551 = vadd.f32 %v539, %v549
    %v552 = vadd.f32 %v540, %v549
    %v553 = vadd.f32 %v541, %v549
    %v554 = vadd.f32 %v542, %v549
    %v555 = vadd.f32 %v543, %v549
    %v556 = vadd.f32 %v544, %v549
    %v557 = vadd.f32 %v545, %v549
    %v558 = vxor.u32 %v550, 2147483648
    %v559 = vxor.u32 %v551, 2147483648
    %v560 = vxor.u32 %v552, 2147483648
    %v561 = vxor.u32 %v553, 2147483648
    %v562 = vxor.u32 %v554, 2147483648
    %v563 = vxor.u32 %v555, 2147483648
    %v564 = vxor.u32 %v556, 2147483648
    %v565 = vxor.u32 %v557, 2147483648
    %v566 = vmul.f32 %v558, 1.442695
    %v567 = vpow.pop %v566
    %v568 = vmul.f32 %v559, 1.442695
    %v569 = vpow.pop %v568
    %v570 = vmul.f32 %v560, 1.442695
    %v571 = vpow.pop %v570
    %v572 = vmul.f32 %v561, 1.442695
    %v573 = vpow.pop %v572
    %v574 = vmul.f32 %v562, 1.442695
    %v575 = vpow.pop %v574
    %v576 = vmul.f32 %v563, 1.442695
    %v577 = vpow.pop %v576
    %v578 = vmul.f32 %v564, 1.442695
    %v579 = vpow.pop %v578
    %v580 = vmul.f32 %v565, 1.442695
    %v581 = vpow.pop %v580
    %v582 = vadd.f32 %v567, 1.0
    %v583 = vadd.f32 %v569, 1.0
    %v584 = vadd.f32 %v571, 1.0
    %v585 = vadd.f32 %v573, 1.0
    %v586 = vadd.f32 %v575, 1.0
    %v587 = vadd.f32 %v577, 1.0
    %v588 = vadd.f32 %v579, 1.0
    %v589 = vadd.f32 %v581, 1.0
    %v590 = vrcp.pop %v582
    %v591 = vmul.f32 1.0, %v590
    %v592 = vrcp.pop %v583
    %v593 = vmul.f32 1.0, %v592
    %v594 = vrcp.pop %v584
    %v595 = vmul.f32 1.0, %v594
    %v596 = vrcp.pop %v585
    %v597 = vmul.f32 1.0, %v596
    %v598 = vrcp.pop %v586
    %v599 = vmul.f32 1.0, %v598
    %v600 = vrcp.pop %v587
    %v601 = vmul.f32 1.0, %v600
    %v602 = vrcp.pop %v588
    %v603 = vmul.f32 1.0, %v602
    %v604 = vrcp.pop %v589
    %v605 = vmul.f32 1.0, %v604
    %v606 = vsub.f32 1.0, %v131
    %v607 = vlaneseq
    %v608 = vshrl.u32 %v607, 7
    %v609 = vsub.s32 0, %v608
    %v610 = vrot.slane %v606, %v609
    %v611 = vmul.f32 %v591, %v610
    %v612 = vmul.f32 %v593, %v610
    %v613 = vmul.f32 %v595, %v610
    %v614 = vmul.f32 %v597, %v610
    %v615 = vmul.f32 %v599, %v610
    %v616 = vmul.f32 %v601, %v610
    %v617 = vmul.f32 %v603, %v610
    %v618 = vmul.f32 %v605, %v610
    %v619 = vlaneseq
    %v620 = vshrl.u32 %v619, 7
    %v621 = vsub.s32 0, %v620
    %v622 = vrot.slane %v131, %v621
    %v623 = vadd.f32 %v622, %v611
    %v624 = vadd.f32 %v622, %v612
    %v625 = vadd.f32 %v622, %v613
    %v626 = vadd.f32 %v622, %v614
    %v627 = vadd.f32 %v622, %v615
    %v628 = vadd.f32 %v622, %v616
    %v629 = vadd.f32 %v622, %v617
    %v630 = vadd.f32 %v622, %v618
    %v631 = vmul.f32 %v526, %v623
    %v632 = vmul.f32 %v527, %v624
    %v633 = vmul.f32 %v528, %v625
    %v634 = vmul.f32 %v529, %v626
    %v635 = vmul.f32 %v530, %v627
    %v636 = vmul.f32 %v531, %v628
    %v637 = vmul.f32 %v532, %v629
    %v638 = vmul.f32 %v533, %v630
    %v639 = vlaneseq
    %v640 = vshrl.u32 %v639, 7
    %v641 = vsub.s32 0, %v640
    %v642 = vrot.slane %v132, %v641
    %v643 = vmul.f32 %v631, %v642
    %v644 = vmul.f32 %v632, %v642
    %v645 = vmul.f32 %v633, %v642
    %v646 = vmul.f32 %v634, %v642
    %v647 = vmul.f32 %v635, %v642
    %v648 = vmul.f32 %v636, %v642
    %v649 = vmul.f32 %v637, %v642
    %v650 = vmul.f32 %v638, %v642
    %vm651 = vcmask 523264
    %v652 = vsel %vm651, %v643, 0.0
    %653 = vadd.xlane.f32.xlu0 %v652
    %v654 = vpop.xlane.xlu0 %653
    %v655 = vsel %vm651, %v644, 0.0
    %656 = vadd.xlane.f32.xlu0 %v655
    %v657 = vpop.xlane.xlu0 %656
    %v658 = vsel %vm651, %v645, 0.0
    %659 = vadd.xlane.f32.xlu0 %v658
    %v660 = vpop.xlane.xlu0 %659
    %v661 = vsel %vm651, %v646, 0.0
    %662 = vadd.xlane.f32.xlu0 %v661
    %v663 = vpop.xlane.xlu0 %662
    %v664 = vsel %vm651, %v647, 0.0
    %665 = vadd.xlane.f32.xlu0 %v664
    %v666 = vpop.xlane.xlu0 %665
    %v667 = vsel %vm651, %v648, 0.0
    %668 = vadd.xlane.f32.xlu0 %v667
    %v669 = vpop.xlane.xlu0 %668
    %v670 = vsel %vm651, %v649, 0.0
    %671 = vadd.xlane.f32.xlu0 %v670
    %v672 = vpop.xlane.xlu0 %671
    %v673 = vsel %vm651, %v650, 0.0
    %674 = vadd.xlane.f32.xlu0 %v673
    %v675 = vpop.xlane.xlu0 %674
    %v676 = vlaneseq
    %v677 = vshrl.u32 %v676, 7
    %v678 = vsub.s32 0, %v677
    %v679 = vrot.slane %v133, %v678
    %v680 = vadd.f32 %v654, %v679
    %v681 = vadd.f32 %v657, %v679
    %v682 = vadd.f32 %v660, %v679
    %v683 = vadd.f32 %v663, %v679
    %v684 = vadd.f32 %v666, %v679
    %v685 = vadd.f32 %v669, %v679
    %v686 = vadd.f32 %v672, %v679
    %v687 = vadd.f32 %v675, %v679
    %689 = vset.pattern.permute.xlu0 0
    %690 = vperm.xlu0 %689, %v680
    %v691 = vpop.permute.xlu0 %690
    %694 = vset.pattern.permute.xlu0 0
    %695 = vperm.xlu0 %694, %v681
    %v696 = vpop.permute.xlu0 %695
    %699 = vset.pattern.permute.xlu0 0
    %700 = vperm.xlu0 %699, %v682
    %v701 = vpop.permute.xlu0 %700
    %704 = vset.pattern.permute.xlu0 0
    %705 = vperm.xlu0 %704, %v683
    %v706 = vpop.permute.xlu0 %705
    %709 = vset.pattern.permute.xlu0 0
    %710 = vperm.xlu0 %709, %v684
    %v711 = vpop.permute.xlu0 %710
    %714 = vset.pattern.permute.xlu0 0
    %715 = vperm.xlu0 %714, %v685
    %v716 = vpop.permute.xlu0 %715
    %719 = vset.pattern.permute.xlu0 0
    %720 = vperm.xlu0 %719, %v686
    %v721 = vpop.permute.xlu0 %720
    %724 = vset.pattern.permute.xlu0 0
    %725 = vperm.xlu0 %724, %v687
    %v726 = vpop.permute.xlu0 %725
    %v728 = vmul.f32 %v691, %v19
    %v729 = vmul.f32 %v696, %v20
    %v730 = vmul.f32 %v701, %v21
    %v731 = vmul.f32 %v706, %v22
    %v732 = vmul.f32 %v711, %v23
    %v733 = vmul.f32 %v716, %v24
    %v734 = vmul.f32 %v721, %v25
    %v735 = vmul.f32 %v726, %v26
    %v736 = vsel %vm134, %v728, 0.0
    %v737 = vrot.slane %v736, 4
    %v738 = vadd.f32 %v736, %v737
    %v739 = vrot.slane %v738, 2
    %v740 = vadd.f32 %v738, %v739
    %v741 = vrot.slane %v740, 1
    %v742 = vadd.f32 %v740, %v741
    %v743 = vsel %vm134, %v729, 0.0
    %v744 = vrot.slane %v743, 4
    %v745 = vadd.f32 %v743, %v744
    %v746 = vrot.slane %v745, 2
    %v747 = vadd.f32 %v745, %v746
    %v748 = vrot.slane %v747, 1
    %v749 = vadd.f32 %v747, %v748
    %v750 = vsel %vm134, %v730, 0.0
    %v751 = vrot.slane %v750, 4
    %v752 = vadd.f32 %v750, %v751
    %v753 = vrot.slane %v752, 2
    %v754 = vadd.f32 %v752, %v753
    %v755 = vrot.slane %v754, 1
    %v756 = vadd.f32 %v754, %v755
    %v757 = vsel %vm134, %v731, 0.0
    %v758 = vrot.slane %v757, 4
    %v759 = vadd.f32 %v757, %v758
    %v760 = vrot.slane %v759, 2
    %v761 = vadd.f32 %v759, %v760
    %v762 = vrot.slane %v761, 1
    %v763 = vadd.f32 %v761, %v762
    %v764 = vsel %vm134, %v732, 0.0
    %v765 = vrot.slane %v764, 4
    %v766 = vadd.f32 %v764, %v765
    %v767 = vrot.slane %v766, 2
    %v768 = vadd.f32 %v766, %v767
    %v769 = vrot.slane %v768, 1
    %v770 = vadd.f32 %v768, %v769
    %v771 = vsel %vm134, %v733, 0.0
    %v772 = vrot.slane %v771, 4
    %v773 = vadd.f32 %v771, %v772
    %v774 = vrot.slane %v773, 2
    %v775 = vadd.f32 %v773, %v774
    %v776 = vrot.slane %v775, 1
    %v777 = vadd.f32 %v775, %v776
    %v778 = vsel %vm134, %v734, 0.0
    %v779 = vrot.slane %v778, 4
    %v780 = vadd.f32 %v778, %v779
    %v781 = vrot.slane %v780, 2
    %v782 = vadd.f32 %v780, %v781
    %v783 = vrot.slane %v782, 1
    %v784 = vadd.f32 %v782, %v783
    %v785 = vsel %vm134, %v735, 0.0
    %v786 = vrot.slane %v785, 4
    %v787 = vadd.f32 %v785, %v786
    %v788 = vrot.slane %v787, 2
    %v789 = vadd.f32 %v787, %v788
    %v790 = vrot.slane %v789, 1
    %v791 = vadd.f32 %v789, %v790
    %vm800 = vcmask 1041409
    %v801 = vsel %vm800, %v749, %v742
    %vm802 = vcmask 1042434
    %v803 = vsel %vm802, %v756, %v801
    %vm804 = vcmask 1043459
    %v805 = vsel %vm804, %v763, %v803
    %vm806 = vcmask 1044484
    %v807 = vsel %vm806, %v770, %v805
    %vm808 = vcmask 1045509
    %v809 = vsel %vm808, %v777, %v807
    %vm810 = vcmask 1046534
    %v811 = vsel %vm810, %v784, %v809
    %vm812 = vcmask 1047559
    %v813 = vsel %vm812, %v791, %v811
    %815 = vst.msk [vmem:[#allocation2] sm:$0xff] %vm134, %v813
    // Predicated region
    $region18: #{tpu_custom_call.1} parent=1 // pred_check
      _
    $region19: #{tpu_custom_call.1} parent=1 // pred_check_branch
      %817 = sbr.rel (0) target = $region21
    $region20: #{tpu_custom_call.1} parent=1 // pred_region
      %s819 = ssub.s32 128, 128
      %820 = vsyncadd [#allocation3], %s819
      %s822 = sshll.u32 [#allocation2], 4
      %s823 = int_to_ptr.vmem [resolvable:$true] %s822
      %825 = dma.vmem_to_hbm [thread:$0]  %s823, 128, %s4, [#allocation3]
    $region21: #{tpu_custom_call.1} parent=1 // pred_fallthru
      _
    // Predicated region
    $region22: #{tpu_custom_call.1} parent=1 // pred_check
      _
    $region23: #{tpu_custom_call.1} parent=1 // pred_check_branch
      %827 = sbr.rel (0) target = $region25
    $region24: #{tpu_custom_call.1} parent=1 // pred_region
      %828 = dma.done [#allocation3], 128
    $region25: #{tpu_custom_call.1} parent=1 // pred_fallthru
      _
    %829 = vsyncpa [#allocation3], 1

</llo_original>
